<compile_context>
chip_gen: v6e
topology: v6e:2x2x1
jax: 0.10.0
libtpu: 0.0.40
codegen_flags: <defaults>
</compile_context>

<pallas_src>
import jax
import jax.numpy as jnp
from jax import lax
from jax.experimental import pallas as pl
from jax.experimental.pallas import tpu as pltpu

_F32 = 4  # bytes


def _make_linear_kernel(n_features, tk):
    """Kernel for y = x @ w + b with K-blocked accumulation."""
    rem = n_features % tk  # static; nonzero only when K-blocked and N % tk != 0

    def kernel(x_ref, w_ref, b_ref, o_ref, acc_ref):
        k = pl.program_id(1)
        nk = pl.num_programs(1)

        @pl.when(k == 0)
        def _init():
            acc_ref[...] = jnp.zeros_like(acc_ref)

        x = x_ref[...]
        if rem:
            # Last K block is partial: zero the out-of-range feature columns so
            # padding garbage in x / w cannot pollute the accumulator.
            is_last = k == nk - 1
            col = lax.broadcasted_iota(jnp.int32, x.shape, 1)
            keep = jnp.logical_or(jnp.logical_not(is_last), col < rem)
            x = jnp.where(keep, x, jnp.zeros_like(x))

        # (TB, tk) @ (tk, 10) on the MXU, f32 accumulation.
        acc_ref[...] += jnp.dot(x, w_ref[...], preferred_element_type=jnp.float32)

        @pl.when(k == nk - 1)
        def _finalize():
            o_ref[...] = (acc_ref[...] + b_ref[...]).astype(o_ref.dtype)

    return kernel


def _select_tiles(B, N):
    """Bytes-based, generation-aware (TB, TK) selection."""
    try:
        vmem_cap = int(pltpu.get_tpu_info().vmem_capacity_bytes)
    except Exception:  # noqa: BLE001 - be robust to API/platform differences
        vmem_cap = 64 << 20  # conservative: v7x per-TC VMEM

    big_vmem = vmem_cap >= (100 << 20)  # v5e/v6e (128 MiB) vs v7x-class (64 MiB)

    # Budget for the double-buffered x stream; weight/bias/out/acc are tiny.
    x_pair_budget = (56 << 20) if big_vmem else (28 << 20)
    per_buf_cap = x_pair_budget // 2
    target_tile_bytes = 8 << 20  # big DMAs amortize the ~0.35us per-step overhead

    # --- K (feature) tiling: keep all of N resident unless a 256-row full-N
    # tile would blow the per-buffer budget; then block K in lane-aligned
    # (multiple-of-128) chunks so TB can stay large on every generation.
    if _F32 * 256 * N <= per_buf_cap:
        tk = N
    else:
        tk = max(128, (per_buf_cap // (_F32 * 256)) // 128 * 128)

    # --- batch tiling: bytes-based, clamped by budget and by (8-aligned) B.
    tb = min(target_tile_bytes, per_buf_cap) // (_F32 * tk)
    tb = max(8, (tb // 8) * 8)
    tb = min(tb, ((B + 7) // 8) * 8)

    # v7x-class parts have 2 TensorCores: make sure the "parallel" batch axis has
    # at least 2 tiles to hand out when B is non-trivial.
    if (not big_vmem) and B >= 32 and tb >= B:
        half = (B + 1) // 2
        tb = min(tb, ((half + 7) // 8) * 8)

    return max(8, tb), tk, vmem_cap


def ll_classifier(x, weight, bias):
    """y = x @ weight.T + bias, matching torch.nn.Linear(n, 10).

    x:      [B, N] float32
    weight: [10, N] float32 (PyTorch layout)
    bias:   [10]    float32
    returns [B, 10] float32
    """
    B, N = x.shape
    out_f = weight.shape[0]  # 10

    # One-time tiny transpose (constant-folded under jit when weight is a
    # parameter): the MXU then consumes (tk, 10) blocks directly, with no
    # per-grid-step transpose in the steady-state loop.
    wt = weight.T                      # [N, 10]
    b2d = bias.reshape(1, out_f)       # [1, 10]

    tb, tk, vmem_cap = _select_tiles(B, N)
    grid = (pl.cdiv(B, tb), pl.cdiv(N, tk))

    # Real VMEM accounting (+25% slack); never clamp below actual usage.
    accounted = _F32 * (
        2 * tb * tk        # x (double-buffered)
        + 2 * tk * out_f   # weight block
        + 2 * out_f        # bias
        + 2 * tb * out_f   # output block
        + tb * out_f       # accumulator scratch
    )
    vmem_limit = accounted + accounted // 4 + (2 << 20)
    vmem_limit = max(vmem_limit, 32 << 20)
    vmem_limit = min(vmem_limit, vmem_cap - (4 << 20))
    vmem_limit = max(vmem_limit, accounted + (1 << 20))

    cost = pl.CostEstimate(
        flops=2 * B * N * out_f,
        transcendentals=0,
        bytes_accessed=_F32 * (B * N + N * out_f + out_f + B * out_f),
    )

    kernel = _make_linear_kernel(N, tk)

    return pl.pallas_call(
        kernel,
        out_shape=jax.ShapeDtypeStruct((B, out_f), x.dtype),
        grid_spec=pltpu.PrefetchScalarGridSpec(
            num_scalar_prefetch=0,
            grid=grid,
            in_specs=[
                pl.BlockSpec((tb, tk), lambda i, k: (i, k)),      # x: streamed
                pl.BlockSpec((tk, out_f), lambda i, k: (k, 0)),   # weight (pre-T)
                pl.BlockSpec((1, out_f), lambda i, k: (0, 0)),    # bias: resident
            ],
            out_specs=pl.BlockSpec((tb, out_f), lambda i, k: (i, 0)),
            scratch_shapes=[pltpu.VMEM((tb, out_f), jnp.float32)],
        ),
        compiler_params=pltpu.CompilerParams(
            dimension_semantics=("parallel", "arbitrary"),
            vmem_limit_bytes=int(vmem_limit),
        ),
        cost_estimate=cost,
    )(x, wt, b2d)


def _reference(x, weight, bias):
    return jnp.dot(x, weight.T, precision=lax.Precision.HIGHEST) + bias


def _check(B, N, key):
    out_f = 10
    k_x, k_w, k_b = jax.random.split(key, 3)
    # Parameter init mirroring the module: weight ~ Normal(0, 0.1),
    # bias ~ Uniform(-1/sqrt(n), 1/sqrt(n)) (PyTorch nn.Linear default).
    weight = 0.1 * jax.random.normal(k_w, (out_f, N), dtype=jnp.float32)
    bound = 1.0 / (N ** 0.5)
    bias = jax.random.uniform(k_b, (out_f,), minval=-bound, maxval=bound,
                              dtype=jnp.float32)
    x = jax.random.normal(k_x, (B, N), dtype=jnp.float32)

    y = ll_classifier(x, weight, bias)
    jax.block_until_ready(y)

    y_ref = _reference(x, weight, bias)
    assert y.shape == (B, out_f)
    assert jnp.allclose(y, y_ref, atol=1e-4, rtol=1e-5), (
        f"mismatch at B={B}, N={N}: max err "
        f"{float(jnp.max(jnp.abs(y - y_ref)))}"
    )


if __name__ == "__main__":
    key = jax.random.PRNGKey(0)
    k0, k1 = jax.random.split(key)

    # Small canonical shape for the module (nn.Linear(n=32, 10), batch=8).
    _check(B=8, N=32, key=k0)
    # Slightly larger shape to exercise multiple batch tiles / partial tiles.
    _check(B=300, N=96, key=k1)

    print("KERNEL_OK")
</pallas_src>

<mosaic_0001>
module attributes {stable_mosaic.version = 11 : i64} {
  func.func @kernel(%arg0: i32, %arg1: i32, %arg2: memref<8x32xf32, #tpu.memory_space<vmem>>, %arg3: memref<32x10xf32, #tpu.memory_space<vmem>>, %arg4: memref<1x10xf32, #tpu.memory_space<vmem>>, %arg5: memref<8x10xf32, #tpu.memory_space<vmem>>, %arg6: memref<8x10xf32, #tpu.memory_space<vmem>>) attributes {dimension_semantics = [#tpu.dimension_semantics<parallel>, #tpu.dimension_semantics<arbitrary>], iteration_bounds = array<i64: 1, 1>, scalar_prefetch = 0 : i64, scratch_operands = 1 : i64, tpu.core_type = #tpu.core_type<tc>, window_params = [{transform_indices = @transform_0, window_bounds = array<i64: 8, 32>}, {transform_indices = @transform_1, window_bounds = array<i64: 32, 10>}, {pipeline_mode = #tpu.pipeline_mode<synchronous>, transform_indices = @transform_2, window_bounds = array<i64: 1, 10>}, {transform_indices = @transform_3, window_bounds = array<i64: 8, 10>}]} {
    %c0_i32 = arith.constant 0 : i32
    %0 = arith.cmpi eq, %arg1, %c0_i32 : i32
    %1 = arith.extui %0 : i1 to i32
    %c0_i32_0 = arith.constant 0 : i32
    %2 = arith.cmpi ne, %1, %c0_i32_0 : i32
    scf.if %2 {
      %cst_10 = arith.constant 0.000000e+00 : f32
      %12 = vector.broadcast %cst_10 : f32 to vector<8x10xf32>
      %c0_11 = arith.constant 0 : index
      %c0_12 = arith.constant 0 : index
      %13 = vector.load %arg6[%c0_11, %c0_12] : memref<8x10xf32, #tpu.memory_space<vmem>>, vector<8x10xf32>
      tpu.vector_store %arg6[%c0_11, %c0_12], %12 {strides = array<i32>} : memref<8x10xf32, #tpu.memory_space<vmem>>, vector<8x10xf32>,
    } else {
    }
    %c0 = arith.constant 0 : index
    %c0_1 = arith.constant 0 : index
    %3 = vector.load %arg2[%c0, %c0_1] : memref<8x32xf32, #tpu.memory_space<vmem>>, vector<8x32xf32>
    %c0_2 = arith.constant 0 : index
    %c0_3 = arith.constant 0 : index
    %4 = vector.load %arg6[%c0_2, %c0_3] : memref<8x10xf32, #tpu.memory_space<vmem>>, vector<8x10xf32>
    %c0_4 = arith.constant 0 : index
    %c0_5 = arith.constant 0 : index
    %5 = vector.load %arg3[%c0_4, %c0_5] : memref<32x10xf32, #tpu.memory_space<vmem>>, vector<32x10xf32>
    %cst = arith.constant dense<0.000000e+00> : vector<8x10xf32>
    %6 = tpu.matmul %3, %5, %cst {dimension_numbers = #tpu.dot_dimension_numbers<[1], [0], [0], [1], [0, 0, 1, 1], [], []>} : vector<8x32xf32>, vector<32x10xf32>, vector<8x10xf32> -> vector<8x10xf32>
    %7 = arith.addf %4, %6 : vector<8x10xf32>
    %c0_6 = arith.constant 0 : index
    %c0_7 = arith.constant 0 : index
    %8 = vector.load %arg6[%c0_6, %c0_7] : memref<8x10xf32, #tpu.memory_space<vmem>>, vector<8x10xf32>
    tpu.vector_store %arg6[%c0_6, %c0_7], %7 {strides = array<i32>} : memref<8x10xf32, #tpu.memory_space<vmem>>, vector<8x10xf32>,
    %c0_i32_8 = arith.constant 0 : i32
    %9 = arith.cmpi eq, %arg1, %c0_i32_8 : i32
    %10 = arith.extui %9 : i1 to i32
    %c0_i32_9 = arith.constant 0 : i32
    %11 = arith.cmpi ne, %10, %c0_i32_9 : i32
    scf.if %11 {
      %c0_10 = arith.constant 0 : index
      %c0_11 = arith.constant 0 : index
      %12 = vector.load %arg6[%c0_10, %c0_11] : memref<8x10xf32, #tpu.memory_space<vmem>>, vector<8x10xf32>
      %c0_12 = arith.constant 0 : index
      %c0_13 = arith.constant 0 : index
      %13 = vector.load %arg4[%c0_12, %c0_13] : memref<1x10xf32, #tpu.memory_space<vmem>>, vector<1x10xf32>
      %14 = vector.broadcast %13 : vector<1x10xf32> to vector<8x10xf32>
      %15 = arith.addf %12, %14 : vector<8x10xf32>
      %c0_14 = arith.constant 0 : index
      %c0_15 = arith.constant 0 : index
      %16 = vector.load %arg5[%c0_14, %c0_15] : memref<8x10xf32, #tpu.memory_space<vmem>>, vector<8x10xf32>
      tpu.vector_store %arg5[%c0_14, %c0_15], %15 {strides = array<i32>} : memref<8x10xf32, #tpu.memory_space<vmem>>, vector<8x10xf32>,
    } else {
    }
    return
  }
  func.func @transform_0(%arg0: i32, %arg1: i32) -> (i32, i32) {
    %c0_i32 = arith.constant 0 : i32
    return %arg0, %arg1 : i32, i32
  }
  func.func @transform_1(%arg0: i32, %arg1: i32) -> (i32, i32) {
    %c0_i32 = arith.constant 0 : i32
    %c0_i32_0 = arith.constant 0 : i32
    return %arg1, %c0_i32 : i32, i32
  }
  func.func @transform_2(%arg0: i32, %arg1: i32) -> (i32, i32) {
    %c0_i32 = arith.constant 0 : i32
    %c0_i32_0 = arith.constant 0 : i32
    %c0_i32_1 = arith.constant 0 : i32
    return %c0_i32, %c0_i32_0 : i32, i32
  }
  func.func @transform_3(%arg0: i32, %arg1: i32) -> (i32, i32) {
    %c0_i32 = arith.constant 0 : i32
    %c0_i32_0 = arith.constant 0 : i32
    return %arg0, %c0_i32 : i32, i32
  }
}

</mosaic_0001>

<llo_original>
// kernel: tpu_custom_call.1
$region0: #{tpu_custom_call.1}
  #allocation0 [shape = 'u32[]', space=smem, size = 0x4, offset = 0x4, fixed_abs, tag = 'smem constant byte address 0x4 - core index']
  #allocation1 [shape = 'u32[144,128]{1,0:T(1,128)}', space=vmem, size = 0x12000, scoped, tag = 'internal scratch']
  #allocation2 [shape = 'f32[8,10]{1,0:T(8,128)}', space=vmem, size = 0x1000, scoped, tag = 'scratch operand']
  %s0 = inlined_call_operand.vmem [shape: f32[8,32], index: 0, kind: input, shape index: {}]
  %s1 = inlined_call_operand.vmem [shape: f32[32,10], index: 1, kind: input, shape index: {}]
  %s2 = inlined_call_operand.vmem [shape: f32[1,10], index: 2, kind: input, shape index: {}]
  %s3 = inlined_call_operand.hbm [shape: f32[8,10], index: 3, kind: output, shape index: {}]
  %s4 = sld [smem:[#allocation0]]
  $region30: #{tpu_custom_call.1} parent=0
    _
  %s6 = ssub.s32 1, %s4
  %s7 = scalar_select 0, %s6, %s4
  $region1: #{tpu_custom_call.1} parent=0
    #allocation3 [shape = 'u8[4096]{0}', space=vmem, size = 0x1000, scoped, tag = 'output window, operand 0, single buffered']
    #allocation4 [shape = 's32[1]{0}', space=sflag, size = 0x4, scoped, tag = 'scoped memory for tpu_custom_call.1']
    %8 = vsyncpa [#allocation4], 0
    // Predicated region
    $region2: #{tpu_custom_call.1} parent=1 // pred_check
      _
    $region3: #{tpu_custom_call.1} parent=1 // pred_check_branch
      %10 = sbr.rel (0) target = $region5
    $region4: #{tpu_custom_call.1} parent=1 // pred_region
      _
    $region5: #{tpu_custom_call.1} parent=1 // pred_fallthru
      _
    // Predicated region
    $region6: #{tpu_custom_call.1} parent=1 // pred_check
      _
    $region7: #{tpu_custom_call.1} parent=1 // pred_check_branch
      %12 = sbr.rel (0) target = $region9
    $region8: #{tpu_custom_call.1} parent=1 // pred_region
      _
    $region9: #{tpu_custom_call.1} parent=1 // pred_fallthru
      _
    // Predicated region
    $region10: #{tpu_custom_call.1} parent=1 // pred_check
      _
    $region11: #{tpu_custom_call.1} parent=1 // pred_check_branch
      %14 = sbr.rel (0) target = $region13
    $region12: #{tpu_custom_call.1} parent=1 // pred_region
      _
    $region13: #{tpu_custom_call.1} parent=1 // pred_fallthru
      _
    %p15 = scmp.eq.s32.totalorder 0, 0
    // Predicated region
    $region14: #{tpu_custom_call.1} parent=1 // pred_check
      %p16 = pneg %p15
    $region15: #{tpu_custom_call.1} parent=1 // pred_check_branch
      %18 = sbr.rel (%p16) target = $region17
    $region16: #{tpu_custom_call.1} parent=1 // pred_region
      %vm19 = vcmask 80896
      %20 = vst.msk [vmem:[#allocation2] sm:$0xff] %vm19, 0.0
    $region17: #{tpu_custom_call.1} parent=1 // pred_fallthru
      _
    %v21 = vld [vmem:[%s0] sm:$0xff]
    %v22 = vld [vmem:[#allocation2] sm:$0xff]
    %v23 = vld [vmem:[%s1] sm:$0xff]
    %v24 = vld [vmem:[%s1 + $0x8] sm:$0xff]
    %v25 = vld [vmem:[%s1 + $0x10] sm:$0xff]
    %v26 = vld [vmem:[%s1 + $0x18] sm:$0xff]
    %vm27 = vcmask 261120
    %v29 = vsel %vm27, %v21, 0
    %31 = vmatprep.subr.mxu0 0.0
    %32 = vmatpush1.msra.mxu0 0.0
    %33 = vmatprep.subr.mxu0 0.0
    %34 = vmatpush1.msra.mxu0 0.0
    %35 = vmatprep.subr.mxu0 0.0
    %36 = vmatpush1.msra.mxu0 0.0
    %37 = vmatprep.subr.mxu0 0.0
    %38 = vmatpush1.msra.mxu0 0.0
    %39 = vmatprep.subr.mxu0 0.0
    %40 = vmatpush1.msra.mxu0 0.0
    %41 = vmatprep.subr.mxu0 0.0
    %42 = vmatpush1.msra.mxu0 0.0
    %43 = vmatprep.subr.mxu0 0.0
    %44 = vmatpush1.msra.mxu0 0.0
    %45 = vmatprep.subr.mxu0 0.0
    %46 = vmatpush1.msra.mxu0 0.0
    %47 = vmatprep.subr.mxu0 0.0
    %48 = vmatpush1.msra.mxu0 0.0
    %49 = vmatprep.subr.mxu0 0.0
    %50 = vmatpush1.msra.mxu0 0.0
    %51 = vmatprep.subr.mxu0 0.0
    %52 = vmatpush1.msra.mxu0 0.0
    %53 = vmatprep.subr.mxu0 0.0
    %54 = vmatpush1.msra.mxu0 0.0
    %55 = vmatprep.subr.mxu0 0.0
    %56 = vmatpush1.msra.mxu0 %v26
    %57 = vmatprep.subr.mxu0 0.0
    %58 = vmatpush1.msra.mxu0 %v25
    %59 = vmatprep.subr.mxu0 0.0
    %60 = vmatpush1.msra.mxu0 %v24
    %61 = vmatprep.subr.mxu0 0.0
    %62 = vmatpush1.msra.mxu0 %v23
    %63 = vmatprep.subr.mxu0 0.0
    %64 = vmatpush2.msra.mxu0 0.0
    %65 = vmatprep.subr.mxu0 0.0
    %66 = vmatpush2.msra.mxu0 0.0
    %67 = vmatprep.subr.mxu0 0.0
    %68 = vmatpush2.msra.mxu0 0.0
    %69 = vmatprep.subr.mxu0 0.0
    %70 = vmatpush2.msra.mxu0 0.0
    %71 = vmatprep.subr.mxu0 0.0
    %72 = vmatpush2.msra.mxu0 0.0
    %73 = vmatprep.subr.mxu0 0.0
    %74 = vmatpush2.msra.mxu0 0.0
    %75 = vmatprep.subr.mxu0 0.0
    %76 = vmatpush2.msra.mxu0 0.0
    %77 = vmatprep.subr.mxu0 0.0
    %78 = vmatpush2.msra.mxu0 0.0
    %79 = vmatprep.subr.mxu0 0.0
    %80 = vmatpush2.msra.mxu0 0.0
    %81 = vmatprep.subr.mxu0 0.0
    %82 = vmatpush2.msra.mxu0 0.0
    %83 = vmatprep.subr.mxu0 0.0
    %84 = vmatpush2.msra.mxu0 0.0
    %85 = vmatprep.subr.mxu0 0.0
    %86 = vmatpush2.msra.mxu0 0.0
    %87 = vmatprep.subr.mxu0 0.0
    %88 = vmatpush2.msra.mxu0 0.0
    %89 = vmatprep.subr.mxu0 0.0
    %90 = vmatpush2.msra.mxu0 0.0
    %91 = vmatprep.subr.mxu0 0.0
    %92 = vmatpush2.msra.mxu0 0.0
    %93 = vmatprep.subr.mxu0 0.0
    %94 = vmatpush2.msra.mxu0 0.0
    %95 = vmatprep.mubr.f32.mxu0 0.0
    %96 = vmatmul.mubr.f32.gmra.mxu0 %v29
    %v97 = vpop.f32.mrf.mxu0
    %v98 = vadd.f32 0.0, %v97
    %v99 = vpop.f32.mrf.mxu0
    %100 = vdwg.mxu0
    %v101 = vadd.f32 %v22, %v98
    %vm102 = vcmask 80896
    %103 = vst.msk [vmem:[#allocation2] sm:$0xff] %vm102, %v101
    // Predicated region
    $region18: #{tpu_custom_call.1} parent=1 // pred_check
      %p104 = pneg %p15
    $region19: #{tpu_custom_call.1} parent=1 // pred_check_branch
      %106 = sbr.rel (%p104) target = $region21
    $region20: #{tpu_custom_call.1} parent=1 // pred_region
      %v107 = vld [vmem:[#allocation2] sm:$0xff]
      %v108 = vld [vmem:[%s2] sm:$0x1]
      %v110 = vlaneseq
      %v111 = vshrl.u32 %v110, 7
      %v112 = vsub.s32 0, %v111
      %v113 = vrot.slane %v108, %v112
      %v115 = vadd.f32 %v107, %v113
      %116 = vst.msk [vmem:[#allocation3] sm:$0xff] %vm102, %v115
    $region21: #{tpu_custom_call.1} parent=1 // pred_fallthru
      _
    // Predicated region
    $region22: #{tpu_custom_call.1} parent=1 // pred_check
      _
    $region23: #{tpu_custom_call.1} parent=1 // pred_check_branch
      %118 = sbr.rel (0) target = $region25
    $region24: #{tpu_custom_call.1} parent=1 // pred_region
      %s120 = ssub.s32 128, 128
      %121 = vsyncadd [#allocation4], %s120
      %s123 = sshll.u32 [#allocation3], 4
      %s124 = int_to_ptr.vmem [resolvable:$true] %s123
      %126 = dma.vmem_to_hbm [thread:$0]  %s124, 128, %s3, [#allocation4]
    $region25: #{tpu_custom_call.1} parent=1 // pred_fallthru
      _
    // Predicated region
    $region26: #{tpu_custom_call.1} parent=1 // pred_check
      _
    $region27: #{tpu_custom_call.1} parent=1 // pred_check_branch
      %128 = sbr.rel (0) target = $region29
    $region28: #{tpu_custom_call.1} parent=1 // pred_region
      %129 = dma.done [#allocation4], 128
    $region29: #{tpu_custom_call.1} parent=1 // pred_fallthru
      _
    %130 = vsyncpa [#allocation4], 1

</llo_original>
